<compile_context>
chip_gen: v7x
topology: tpu7x:2x2x1
jax: 0.10.0
libtpu: 0.0.40
codegen_flags: <defaults>
</compile_context>

<pallas_src>
import math
import jax
import jax.numpy as jnp
from jax.experimental import pallas as pl
from jax.experimental.pallas import tpu as pltpu


def _round_up(x, m):
    return (x + m - 1) // m * m


# ----------------------------- Pallas kernel ---------------------------------
def data_embedding_kernel(xcat_ref, marks_ref, wflat_ref, table_ref, o_ref):
    # value embedding: circular conv1d(kernel=3) as one MXU matmul
    acc = jnp.dot(xcat_ref[...], wflat_ref[...],
                  preferred_element_type=jnp.float32)        # (TM, Dp) f32

    # temporal embedding: four fixed-embedding gathers fused into one
    # multi-hot (TM, 76) @ (76, Dp) matmul. Mark indices arrive pre-offset
    # (month:+0, day:+13, weekday:+45, hour:+52) from the wrapper.
    marks = marks_ref[...]                                   # (TM, 4) int32
    tm = marks.shape[0]
    ksz = table_ref.shape[0]                                 # 76
    iota = jax.lax.broadcasted_iota(jnp.int32, (tm, ksz), 1)
    tdt = table_ref.dtype
    multihot = ((iota == marks[:, 0:1]).astype(tdt)
                + (iota == marks[:, 1:2]).astype(tdt)
                + (iota == marks[:, 2:3]).astype(tdt)
                + (iota == marks[:, 3:4]).astype(tdt))
    acc = acc + jnp.dot(multihot, table_ref[...],
                        preferred_element_type=jnp.float32)

    # TODO(synk): dropout omitted (identity at inference); training-mode dropout
    # would use pltpu.prng_seed / pltpu.prng_random_bits.
    o_ref[...] = acc.astype(o_ref.dtype)


# ------------------------------ Wrapper ---------------------------------------
def sinusoidal_table(c_in, d_model):
    """FixedEmbedding / PositionalEmbedding sinusoidal table (c_in, d_model)."""
    pos = jnp.arange(c_in, dtype=jnp.float32)[:, None]
    div = jnp.exp(jnp.arange(0, d_model, 2, dtype=jnp.float32)
                  * -(math.log(10000.0) / d_model))
    tbl = jnp.zeros((c_in, d_model), jnp.float32)
    tbl = tbl.at[:, 0::2].set(jnp.sin(pos * div))
    tbl = tbl.at[:, 1::2].set(jnp.cos(pos * div))
    return tbl


def data_embedding_wo_pos(x, x_mark, conv_w, tables, *,
                          tile_m=1024, compute_dtype=jnp.float32):
    """
    x:      (B, L, c_in) float32
    x_mark: (B, L, 4)    int32  columns = [month, day, weekday, hour]
    conv_w: (3, c_in, d_model)  float32  (tap k, input channel, output channel)
            equivalent to torch Conv1d weight[d, c, k] = conv_w[k, c, d]
    tables: dict with 'month' (13,d), 'day' (32,d), 'weekday' (7,d), 'hour' (24,d)
    compute_dtype: jnp.float32 (exact) or jnp.bfloat16 (faster MXU/DMA, f32 acc).
    """
    B, L, c_in = x.shape
    d_model = conv_w.shape[-1]
    N = B * L
    Dp = _round_up(d_model, 128)                 # lane-dense output feature dim

    # circular neighbors: out[t] = W0 @ x[t-1] + W1 @ x[t] + W2 @ x[t+1] (mod L)
    # NOTE: keeping the concatenated xcat in HBM is accepted — input-side bytes
    # (3*c_in per row) are minor vs the (Dp) output write for this workload.
    xcat = jnp.concatenate(
        [jnp.roll(x, 1, axis=1), x, jnp.roll(x, -1, axis=1)], axis=-1
    ).reshape(N, 3 * c_in).astype(compute_dtype)

    wflat = conv_w.reshape(3 * c_in, d_model).astype(compute_dtype)
    wflat = jnp.pad(wflat, ((0, 0), (0, Dp - d_model)))

    # fused temporal table: month(13) | day(32) | weekday(7) | hour(24) = 76 rows
    offsets = jnp.asarray([0, 13, 45, 52], jnp.int32)
    fused_tbl = jnp.concatenate(
        [tables['month'], tables['day'], tables['weekday'], tables['hour']],
        axis=0).astype(compute_dtype)
    fused_tbl = jnp.pad(fused_tbl, ((0, 0), (0, Dp - d_model)))
    ksz = fused_tbl.shape[0]                     # 76

    marks = x_mark.reshape(N, 4).astype(jnp.int32) + offsets[None, :]

    # tile over the token dimension; pad the remainder tile.
    TM = min(tile_m, _round_up(N, 8))
    N_pad = _round_up(N, TM)
    if N_pad != N:
        xcat = jnp.pad(xcat, ((0, N_pad - N), (0, 0)))
        marks = jnp.pad(marks, ((0, N_pad - N), (0, 0)))
    grid = (N_pad // TM,)

    elt = jnp.dtype(compute_dtype).itemsize
    cost = pl.CostEstimate(
        flops=2 * N_pad * (3 * c_in + ksz) * Dp,
        transcendentals=0,
        bytes_accessed=(N_pad * (3 * c_in * elt + 4 * 4 + Dp * 4)
                        + (wflat.size + fused_tbl.size) * elt))

    out = pl.pallas_call(
        data_embedding_kernel,
        out_shape=jax.ShapeDtypeStruct((N_pad, Dp), jnp.float32),
        grid_spec=pltpu.PrefetchScalarGridSpec(
            num_scalar_prefetch=0,
            grid=grid,
            in_specs=[
                pl.BlockSpec((TM, 3 * c_in), lambda i: (i, 0)),   # tiled over N
                pl.BlockSpec((TM, 4),        lambda i: (i, 0)),   # tiled over N
                pl.BlockSpec((3 * c_in, Dp), lambda i: (0, 0)),   # VMEM-resident
                pl.BlockSpec((ksz, Dp),      lambda i: (0, 0)),   # VMEM-resident
            ],
            out_specs=pl.BlockSpec((TM, Dp), lambda i: (i, 0)),
        ),
        compiler_params=pltpu.CompilerParams(
            dimension_semantics=("parallel",)),
        cost_estimate=cost,
    )(xcat, marks, wflat, fused_tbl)

    return out[:N, :d_model].reshape(B, L, d_model)


# ------------------------------ Reference -------------------------------------
def reference(x, x_mark, conv_w, tables):
    B, L, c_in = x.shape
    d_model = conv_w.shape[-1]
    xcat = jnp.concatenate(
        [jnp.roll(x, 1, axis=1), x, jnp.roll(x, -1, axis=1)], axis=-1)
    val = jnp.einsum('blf,fd->bld', xcat, conv_w.reshape(3 * c_in, d_model))
    temp = (tables['month'][x_mark[..., 0]] + tables['day'][x_mark[..., 1]]
            + tables['weekday'][x_mark[..., 2]] + tables['hour'][x_mark[..., 3]])
    return val + temp


# --------------------------------- Main ---------------------------------------
if __name__ == "__main__":
    B, L, c_in, d_model = 2, 8, 4, 32

    key = jax.random.PRNGKey(0)
    kx, kw, km = jax.random.split(key, 3)

    x = jax.random.normal(kx, (B, L, c_in), dtype=jnp.float32)

    # kaiming_normal_(fan_in, leaky_relu): std = gain / sqrt(fan_in), fan_in = c_in*3
    gain = math.sqrt(2.0)
    std = gain / math.sqrt(c_in * 3)
    conv_w = std * jax.random.normal(kw, (3, c_in, d_model), dtype=jnp.float32)

    # time marks: [month, day, weekday, hour]
    month = jax.random.randint(km, (B, L, 1), 0, 13)
    day = jax.random.randint(jax.random.fold_in(km, 1), (B, L, 1), 0, 32)
    wd = jax.random.randint(jax.random.fold_in(km, 2), (B, L, 1), 0, 7)
    hr = jax.random.randint(jax.random.fold_in(km, 3), (B, L, 1), 0, 24)
    x_mark = jnp.concatenate([month, day, wd, hr], axis=-1).astype(jnp.int32)

    tables = {
        'month': sinusoidal_table(13, d_model),
        'day': sinusoidal_table(32, d_model),
        'weekday': sinusoidal_table(7, d_model),
        'hour': sinusoidal_table(24, d_model),
    }

    out = data_embedding_wo_pos(x, x_mark, conv_w, tables)
    out = jax.block_until_ready(out)

    ref = reference(x, x_mark, conv_w, tables)
    assert out.shape == (B, L, d_model)
    assert jnp.allclose(out, ref, atol=1e-5, rtol=1e-5), "mismatch vs reference"
    print("KERNEL_OK")
</pallas_src>

<mosaic_0001>
module attributes {stable_mosaic.version = 11 : i64} {
  func.func @data_embedding_kernel(%arg0: i32, %arg1: memref<16x12xf32, #tpu.memory_space<vmem>>, %arg2: memref<16x4xi32, #tpu.memory_space<vmem>>, %arg3: memref<12x128xf32, #tpu.memory_space<vmem>>, %arg4: memref<76x128xf32, #tpu.memory_space<vmem>>, %arg5: memref<16x128xf32, #tpu.memory_space<vmem>>) attributes {dimension_semantics = [#tpu.dimension_semantics<parallel>], iteration_bounds = array<i64: 1>, scalar_prefetch = 0 : i64, scratch_operands = 0 : i64, tpu.core_type = #tpu.core_type<tc>, window_params = [{transform_indices = @transform_0, window_bounds = array<i64: 16, 12>}, {transform_indices = @transform_1, window_bounds = array<i64: 16, 4>}, {pipeline_mode = #tpu.pipeline_mode<synchronous>, transform_indices = @transform_2, window_bounds = array<i64: 12, 128>}, {pipeline_mode = #tpu.pipeline_mode<synchronous>, transform_indices = @transform_3, window_bounds = array<i64: 76, 128>}, {transform_indices = @transform_4, window_bounds = array<i64: 16, 128>}]} {
    %c0 = arith.constant 0 : index
    %c0_0 = arith.constant 0 : index
    %0 = vector.load %arg1[%c0, %c0_0] : memref<16x12xf32, #tpu.memory_space<vmem>>, vector<16x12xf32>
    %c0_1 = arith.constant 0 : index
    %c0_2 = arith.constant 0 : index
    %1 = vector.load %arg3[%c0_1, %c0_2] : memref<12x128xf32, #tpu.memory_space<vmem>>, vector<12x128xf32>
    %cst = arith.constant dense<0.000000e+00> : vector<16x128xf32>
    %2 = tpu.matmul %0, %1, %cst {dimension_numbers = #tpu.dot_dimension_numbers<[1], [0], [0], [1], [0, 0, 1, 1], [], []>} : vector<16x12xf32>, vector<12x128xf32>, vector<16x128xf32> -> vector<16x128xf32>
    %c0_3 = arith.constant 0 : index
    %c0_4 = arith.constant 0 : index
    %3 = vector.load %arg2[%c0_3, %c0_4] : memref<16x4xi32, #tpu.memory_space<vmem>>, vector<16x4xi32>
    %4 = tpu.iota {dimensions = array<i32: 1>} : vector<16x76xi32>
    %5 = vector.extract_strided_slice %3 {offsets = [0, 0], sizes = [16, 1], strides = [1, 1]} : vector<16x4xi32> to vector<16x1xi32>
    %6 = vector.broadcast %5 : vector<16x1xi32> to vector<16x76xi32>
    %7 = arith.cmpi eq, %4, %6 : vector<16x76xi32>
    %8 = arith.extui %7 : vector<16x76xi1> to vector<16x76xi32>
    %9 = arith.sitofp %8 : vector<16x76xi32> to vector<16x76xf32>
    %10 = vector.extract_strided_slice %3 {offsets = [0, 1], sizes = [16, 1], strides = [1, 1]} : vector<16x4xi32> to vector<16x1xi32>
    %11 = vector.broadcast %10 : vector<16x1xi32> to vector<16x76xi32>
    %12 = arith.cmpi eq, %4, %11 : vector<16x76xi32>
    %13 = arith.extui %12 : vector<16x76xi1> to vector<16x76xi32>
    %14 = arith.sitofp %13 : vector<16x76xi32> to vector<16x76xf32>
    %15 = arith.addf %9, %14 : vector<16x76xf32>
    %16 = vector.extract_strided_slice %3 {offsets = [0, 2], sizes = [16, 1], strides = [1, 1]} : vector<16x4xi32> to vector<16x1xi32>
    %17 = vector.broadcast %16 : vector<16x1xi32> to vector<16x76xi32>
    %18 = arith.cmpi eq, %4, %17 : vector<16x76xi32>
    %19 = arith.extui %18 : vector<16x76xi1> to vector<16x76xi32>
    %20 = arith.sitofp %19 : vector<16x76xi32> to vector<16x76xf32>
    %21 = arith.addf %15, %20 : vector<16x76xf32>
    %22 = vector.extract_strided_slice %3 {offsets = [0, 3], sizes = [16, 1], strides = [1, 1]} : vector<16x4xi32> to vector<16x1xi32>
    %23 = vector.broadcast %22 : vector<16x1xi32> to vector<16x76xi32>
    %24 = arith.cmpi eq, %4, %23 : vector<16x76xi32>
    %25 = arith.extui %24 : vector<16x76xi1> to vector<16x76xi32>
    %26 = arith.sitofp %25 : vector<16x76xi32> to vector<16x76xf32>
    %27 = arith.addf %21, %26 : vector<16x76xf32>
    %c0_5 = arith.constant 0 : index
    %c0_6 = arith.constant 0 : index
    %28 = vector.load %arg4[%c0_5, %c0_6] : memref<76x128xf32, #tpu.memory_space<vmem>>, vector<76x128xf32>
    %cst_7 = arith.constant dense<0.000000e+00> : vector<16x128xf32>
    %29 = tpu.matmul %27, %28, %cst_7 {dimension_numbers = #tpu.dot_dimension_numbers<[1], [0], [0], [1], [0, 0, 1, 1], [], []>} : vector<16x76xf32>, vector<76x128xf32>, vector<16x128xf32> -> vector<16x128xf32>
    %30 = arith.addf %2, %29 : vector<16x128xf32>
    %c0_8 = arith.constant 0 : index
    %c0_9 = arith.constant 0 : index
    %31 = vector.load %arg5[%c0_8, %c0_9] : memref<16x128xf32, #tpu.memory_space<vmem>>, vector<16x128xf32>
    tpu.vector_store %arg5[%c0_8, %c0_9], %30 {strides = array<i32>} : memref<16x128xf32, #tpu.memory_space<vmem>>, vector<16x128xf32>,
    return
  }
  func.func @transform_0(%arg0: i32) -> (i32, i32) {
    %c0_i32 = arith.constant 0 : i32
    %c0_i32_0 = arith.constant 0 : i32
    return %arg0, %c0_i32 : i32, i32
  }
  func.func @transform_1(%arg0: i32) -> (i32, i32) {
    %c0_i32 = arith.constant 0 : i32
    %c0_i32_0 = arith.constant 0 : i32
    return %arg0, %c0_i32 : i32, i32
  }
  func.func @transform_2(%arg0: i32) -> (i32, i32) {
    %c0_i32 = arith.constant 0 : i32
    %c0_i32_0 = arith.constant 0 : i32
    %c0_i32_1 = arith.constant 0 : i32
    return %c0_i32, %c0_i32_0 : i32, i32
  }
  func.func @transform_3(%arg0: i32) -> (i32, i32) {
    %c0_i32 = arith.constant 0 : i32
    %c0_i32_0 = arith.constant 0 : i32
    %c0_i32_1 = arith.constant 0 : i32
    return %c0_i32, %c0_i32_0 : i32, i32
  }
  func.func @transform_4(%arg0: i32) -> (i32, i32) {
    %c0_i32 = arith.constant 0 : i32
    %c0_i32_0 = arith.constant 0 : i32
    return %arg0, %c0_i32 : i32, i32
  }
}

</mosaic_0001>

<llo_original>
// kernel: tpu_custom_call.1
$region0: #{tpu_custom_call.1}
  #allocation0 [shape = 'u32[]', space=smem, size = 0x4, offset = 0x4, fixed_abs, tag = 'smem constant byte address 0x4 - core index']
  #allocation1 [shape = 'u32[144,128]{1,0:T(1,128)}', space=vmem, size = 0x12000, scoped, tag = 'internal scratch']
  %s0 = inlined_call_operand.vmem [shape: f32[16,12], index: 0, kind: input, shape index: {}]
  %s1 = inlined_call_operand.vmem [shape: s32[16,4], index: 1, kind: input, shape index: {}]
  %s2 = inlined_call_operand.hbm [shape: f32[12,128], index: 2, kind: input, shape index: {}]
  %s3 = inlined_call_operand.hbm [shape: f32[76,128], index: 3, kind: input, shape index: {}]
  %s4 = inlined_call_operand.hbm [shape: f32[16,128], index: 4, kind: output, shape index: {}]
  %s5 = sld [smem:[#allocation0]]
  $region34: #{tpu_custom_call.1} parent=0
    _
  %s7 = ssub.s32 1, %s5
  %s8 = scalar_select 0, %s7, %s5
  $region1: #{tpu_custom_call.1} parent=0
    #allocation2 [shape = 'u8[8192]{0}', space=vmem, size = 0x2000, scoped, tag = 'input window, operand 2, single buffered']
    #allocation3 [shape = 's32[1]{0}', space=sflag, size = 0x4, scoped, tag = 'scoped memory for tpu_custom_call.1']
    #allocation4 [shape = 's32[1]{0}', space=sflag, size = 0x4, scoped, tag = 'scoped memory for tpu_custom_call.1']
    #allocation5 [shape = 'u8[40960]{0}', space=vmem, size = 0xa000, scoped, tag = 'input window, operand 3, single buffered']
    #allocation6 [shape = 's32[1]{0}', space=sflag, size = 0x4, scoped, tag = 'scoped memory for tpu_custom_call.1']
    #allocation7 [shape = 'u8[8192]{0}', space=vmem, size = 0x2000, scoped, tag = 'output window, operand 0, single buffered']
    %9 = vsyncpa [#allocation3], 0
    %10 = vsyncpa [#allocation6], 0
    %11 = vsyncpa [#allocation4], 0
    // Predicated region
    $region2: #{tpu_custom_call.1} parent=1 // pred_check
      _
    $region3: #{tpu_custom_call.1} parent=1 // pred_check_branch
      %13 = sbr.rel (0) target = $region5
    $region4: #{tpu_custom_call.1} parent=1 // pred_region
      _
    $region5: #{tpu_custom_call.1} parent=1 // pred_fallthru
      _
    // Predicated region
    $region6: #{tpu_custom_call.1} parent=1 // pred_check
      _
    $region7: #{tpu_custom_call.1} parent=1 // pred_check_branch
      %15 = sbr.rel (0) target = $region9
    $region8: #{tpu_custom_call.1} parent=1 // pred_region
      _
    $region9: #{tpu_custom_call.1} parent=1 // pred_fallthru
      _
    // Predicated region
    $region10: #{tpu_custom_call.1} parent=1 // pred_check
      _
    $region11: #{tpu_custom_call.1} parent=1 // pred_check_branch
      %17 = sbr.rel (0) target = $region13
    $region12: #{tpu_custom_call.1} parent=1 // pred_region
      %s19 = ssub.s32 256, 256
      %20 = vsyncadd [#allocation3], %s19
      %s21 = sshll.u32 [#allocation2], 4
      %s22 = int_to_ptr.vmem [resolvable:$true] %s21
      %27 = dma.hbm_to_vmem [thread:$0]  %s2, 256, %s22, [#allocation3], 128, 128, 8
    $region13: #{tpu_custom_call.1} parent=1 // pred_fallthru
      _
    // Predicated region
    $region14: #{tpu_custom_call.1} parent=1 // pred_check
      _
    $region15: #{tpu_custom_call.1} parent=1 // pred_check_branch
      %29 = sbr.rel (0) target = $region17
    $region16: #{tpu_custom_call.1} parent=1 // pred_region
      %s31 = ssub.s32 1280, 1280
      %32 = vsyncadd [#allocation6], %s31
      %s33 = sshll.u32 [#allocation5], 4
      %s34 = int_to_ptr.vmem [resolvable:$true] %s33
      %39 = dma.hbm_to_vmem [thread:$0]  %s3, 1280, %s34, [#allocation6], 128, 128, 8
    $region17: #{tpu_custom_call.1} parent=1 // pred_fallthru
      _
    // Predicated region
    $region18: #{tpu_custom_call.1} parent=1 // pred_check
      _
    $region19: #{tpu_custom_call.1} parent=1 // pred_check_branch
      %41 = sbr.rel (0) target = $region21
    $region20: #{tpu_custom_call.1} parent=1 // pred_region
      %42 = dma.done [#allocation3], 256
    $region21: #{tpu_custom_call.1} parent=1 // pred_fallthru
      _
    // Predicated region
    $region22: #{tpu_custom_call.1} parent=1 // pred_check
      _
    $region23: #{tpu_custom_call.1} parent=1 // pred_check_branch
      %44 = sbr.rel (0) target = $region25
    $region24: #{tpu_custom_call.1} parent=1 // pred_region
      %45 = dma.done [#allocation6], 1280
    $region25: #{tpu_custom_call.1} parent=1 // pred_fallthru
      _
    %v46 = vld [vmem:[%s0] sm:$0xff]
    %v47 = vld [vmem:[%s0 + $0x8] sm:$0xff]
    %v48 = vld [vmem:[#allocation2] sm:$0xff]
    %v49 = vld [vmem:[#allocation2 + $0x8] sm:$0xf]
    %v50 = vld [vmem:[%s1] sm:$0xff]
    %v51 = vld [vmem:[%s1 + $0x8] sm:$0xff]
    %v52 = vlaneseq
    %v53 = vand.u32 %v52, 127
    %54 = vset.pattern.permute.xlu0 0
    %55 = vperm.xlu0 %54, %v50
    %v56 = vpop.permute.xlu0 %55
    %57 = vset.pattern.permute.xlu0 0
    %58 = vperm.xlu0 %57, %v51
    %v59 = vpop.permute.xlu0 %58
    %vm60 = vcmp.eq.s32.totalorder %v53, %v56
    %vm61 = vcmp.eq.s32.totalorder %v53, %v59
    %v62 = vsel %vm60, 1, 0
    %v63 = vsel %vm61, 1, 0
    %v64 = vcvt.s32.f32 %v62
    %v65 = vcvt.s32.f32 %v63
    %66 = vset.pattern.permute.xlu0 1
    %67 = vperm.xlu0 %66, %v50
    %v68 = vpop.permute.xlu0 %67
    %69 = vset.pattern.permute.xlu0 1
    %70 = vperm.xlu0 %69, %v51
    %v71 = vpop.permute.xlu0 %70
    %vm72 = vcmp.eq.s32.totalorder %v53, %v68
    %vm73 = vcmp.eq.s32.totalorder %v53, %v71
    %v74 = vsel %vm72, 1, 0
    %v75 = vsel %vm73, 1, 0
    %v76 = vcvt.s32.f32 %v74
    %v77 = vcvt.s32.f32 %v75
    %v78 = vadd.f32 %v64, %v76
    %v79 = vadd.f32 %v65, %v77
    %80 = vset.pattern.permute.xlu0 2
    %81 = vperm.xlu0 %80, %v50
    %v82 = vpop.permute.xlu0 %81
    %83 = vset.pattern.permute.xlu0 2
    %84 = vperm.xlu0 %83, %v51
    %v85 = vpop.permute.xlu0 %84
    %vm86 = vcmp.eq.s32.totalorder %v53, %v82
    %vm87 = vcmp.eq.s32.totalorder %v53, %v85
    %v88 = vsel %vm86, 1, 0
    %v89 = vsel %vm87, 1, 0
    %v90 = vcvt.s32.f32 %v88
    %v91 = vcvt.s32.f32 %v89
    %v92 = vadd.f32 %v78, %v90
    %v93 = vadd.f32 %v79, %v91
    %94 = vset.pattern.permute.xlu0 3
    %95 = vperm.xlu0 %94, %v50
    %v96 = vpop.permute.xlu0 %95
    %97 = vset.pattern.permute.xlu0 3
    %98 = vperm.xlu0 %97, %v51
    %v99 = vpop.permute.xlu0 %98
    %vm100 = vcmp.eq.s32.totalorder %v53, %v96
    %vm101 = vcmp.eq.s32.totalorder %v53, %v99
    %v102 = vsel %vm100, 1, 0
    %v103 = vsel %vm101, 1, 0
    %v104 = vcvt.s32.f32 %v102
    %v105 = vcvt.s32.f32 %v103
    %v106 = vadd.f32 %v92, %v104
    %v107 = vadd.f32 %v93, %v105
    %v108 = vld [vmem:[#allocation5] sm:$0xff]
    %v109 = vld [vmem:[#allocation5 + $0x8] sm:$0xff]
    %v110 = vld [vmem:[#allocation5 + $0x10] sm:$0xff]
    %v111 = vld [vmem:[#allocation5 + $0x18] sm:$0xff]
    %v112 = vld [vmem:[#allocation5 + $0x20] sm:$0xff]
    %v113 = vld [vmem:[#allocation5 + $0x28] sm:$0xff]
    %v114 = vld [vmem:[#allocation5 + $0x30] sm:$0xff]
    %v115 = vld [vmem:[#allocation5 + $0x38] sm:$0xff]
    %v116 = vld [vmem:[#allocation5 + $0x40] sm:$0xff]
    %v117 = vld [vmem:[#allocation5 + $0x48] sm:$0xf]
    %vm118 = vcmask 621568
    %v120 = vsel %vm118, %v106, 0
    %v123 = vsel %vm118, %v107, 0
    %vm125 = vcmask 1043456
    %v127 = vsel %vm125, %v117, 0
    %129 = vmatprep.subr.mxu0 0.0
    %130 = vmatpush1.msra.mxu0 %v108
    %131 = vmatprep.subr.mxu0 0.0
    %132 = vmatpush1.msra.mxu0 %v109
    %133 = vmatprep.subr.mxu0 0.0
    %134 = vmatpush1.msra.mxu0 %v110
    %135 = vmatprep.subr.mxu0 0.0
    %136 = vmatpush1.msra.mxu0 %v111
    %137 = vmatprep.subr.mxu0 0.0
    %138 = vmatpush1.msra.mxu0 %v112
    %139 = vmatprep.subr.mxu0 0.0
    %140 = vmatpush1.msra.mxu0 %v113
    %141 = vmatprep.subr.mxu0 0.0
    %142 = vmatpush1.msra.mxu0 %v114
    %143 = vmatprep.subr.mxu0 0.0
    %144 = vmatpush1.msra.mxu0 %v115
    %145 = vmatprep.subr.mxu0 0.0
    %146 = vmatpush1.msra.mxu0 %v116
    %147 = vmatprep.subr.mxu0 0.0
    %148 = vmatpush1.msra.mxu0 %v127
    %149 = vmatprep.subr.mxu0 0.0
    %150 = vmatpush1.msra.mxu0 0.0
    %151 = vmatprep.subr.mxu0 0.0
    %152 = vmatpush1.msra.mxu0 0.0
    %153 = vmatprep.subr.mxu0 0.0
    %154 = vmatpush1.msra.mxu0 0.0
    %155 = vmatprep.subr.mxu0 0.0
    %156 = vmatpush1.msra.mxu0 0.0
    %157 = vmatprep.subr.mxu0 0.0
    %158 = vmatpush1.msra.mxu0 0.0
    %159 = vmatprep.subr.mxu0 0.0
    %160 = vmatpush1.msra.mxu0 0.0
    %161 = vmatprep.subr.mxu0 0.0
    %162 = vmatpush1.msra.mxu0 0.0
    %163 = vmatprep.subr.mxu0 0.0
    %164 = vmatpush1.msra.mxu0 0.0
    %165 = vmatprep.subr.mxu0 0.0
    %166 = vmatpush1.msra.mxu0 0.0
    %167 = vmatprep.subr.mxu0 0.0
    %168 = vmatpush1.msra.mxu0 0.0
    %169 = vmatprep.subr.mxu0 0.0
    %170 = vmatpush1.msra.mxu0 0.0
    %171 = vmatprep.subr.mxu0 0.0
    %172 = vmatpush1.msra.mxu0 0.0
    %173 = vmatprep.subr.mxu0 0.0
    %174 = vmatpush1.msra.mxu0 0.0
    %175 = vmatprep.subr.mxu0 0.0
    %176 = vmatpush1.msra.mxu0 0.0
    %177 = vmatprep.subr.mxu0 0.0
    %178 = vmatpush1.msra.mxu0 0.0
    %179 = vmatprep.subr.mxu0 0.0
    %180 = vmatpush1.msra.mxu0 0.0
    %181 = vmatprep.subr.mxu0 0.0
    %182 = vmatpush1.msra.mxu0 0.0
    %183 = vmatprep.subr.mxu0 0.0
    %184 = vmatpush1.msra.mxu0 0.0
    %185 = vmatprep.subr.mxu0 0.0
    %186 = vmatpush1.msra.mxu0 0.0
    %187 = vmatprep.subr.mxu0 0.0
    %188 = vmatpush1.msra.mxu0 0.0
    %189 = vmatprep.subr.mxu0 0.0
    %190 = vmatpush1.msra.mxu0 0.0
    %191 = vmatprep.subr.mxu0 0.0
    %192 = vmatpush1.msra.mxu0 0.0
    %193 = vmatprep.mubr.f32.mxu0 0.0
    %194 = vmatmul.mubr.f32.gmra.mrb[0].mxu0 %v120
    %v195 = vpop.f32.mrb[0].mxu0
    %v196 = vadd.f32 0.0, %v195
    %v197 = vpop.f32.mrb[0].mxu0
    %198 = vmatprep.mubr.f32.mxu0 0.0
    %199 = vmatmul.mubr.f32.gmra.mrb[0].mxu0 %v123
    %v200 = vpop.f32.mrb[0].mxu0
    %v201 = vadd.f32 0.0, %v200
    %v202 = vpop.f32.mrb[0].mxu0
    %203 = vdwg.mxu0
    %vm204 = vcmask 97280
    %v206 = vsel %vm204, %v46, 0
    %v209 = vsel %vm204, %v47, 0
    %v212 = vsel %vm125, %v49, 0
    %214 = vmatprep.subr.mxu0 0.0
    %215 = vmatpush1.msra.mxu0 %v48
    %216 = vmatprep.subr.mxu0 0.0
    %217 = vmatpush1.msra.mxu0 %v212
    %218 = vmatprep.subr.mxu0 0.0
    %219 = vmatpush1.msra.mxu0 0.0
    %220 = vmatprep.subr.mxu0 0.0
    %221 = vmatpush1.msra.mxu0 0.0
    %222 = vmatprep.subr.mxu0 0.0
    %223 = vmatpush1.msra.mxu0 0.0
    %224 = vmatprep.subr.mxu0 0.0
    %225 = vmatpush1.msra.mxu0 0.0
    %226 = vmatprep.subr.mxu0 0.0
    %227 = vmatpush1.msra.mxu0 0.0
    %228 = vmatprep.subr.mxu0 0.0
    %229 = vmatpush1.msra.mxu0 0.0
    %230 = vmatprep.subr.mxu0 0.0
    %231 = vmatpush1.msra.mxu0 0.0
    %232 = vmatprep.subr.mxu0 0.0
    %233 = vmatpush1.msra.mxu0 0.0
    %234 = vmatprep.subr.mxu0 0.0
    %235 = vmatpush1.msra.mxu0 0.0
    %236 = vmatprep.subr.mxu0 0.0
    %237 = vmatpush1.msra.mxu0 0.0
    %238 = vmatprep.subr.mxu0 0.0
    %239 = vmatpush1.msra.mxu0 0.0
    %240 = vmatprep.subr.mxu0 0.0
    %241 = vmatpush1.msra.mxu0 0.0
    %242 = vmatprep.subr.mxu0 0.0
    %243 = vmatpush1.msra.mxu0 0.0
    %244 = vmatprep.subr.mxu0 0.0
    %245 = vmatpush1.msra.mxu0 0.0
    %246 = vmatprep.subr.mxu0 0.0
    %247 = vmatpush1.msra.mxu0 0.0
    %248 = vmatprep.subr.mxu0 0.0
    %249 = vmatpush1.msra.mxu0 0.0
    %250 = vmatprep.subr.mxu0 0.0
    %251 = vmatpush1.msra.mxu0 0.0
    %252 = vmatprep.subr.mxu0 0.0
    %253 = vmatpush1.msra.mxu0 0.0
    %254 = vmatprep.subr.mxu0 0.0
    %255 = vmatpush1.msra.mxu0 0.0
    %256 = vmatprep.subr.mxu0 0.0
    %257 = vmatpush1.msra.mxu0 0.0
    %258 = vmatprep.subr.mxu0 0.0
    %259 = vmatpush1.msra.mxu0 0.0
    %260 = vmatprep.subr.mxu0 0.0
    %261 = vmatpush1.msra.mxu0 0.0
    %262 = vmatprep.subr.mxu0 0.0
    %263 = vmatpush1.msra.mxu0 0.0
    %264 = vmatprep.subr.mxu0 0.0
    %265 = vmatpush1.msra.mxu0 0.0
    %266 = vmatprep.subr.mxu0 0.0
    %267 = vmatpush1.msra.mxu0 0.0
    %268 = vmatprep.subr.mxu0 0.0
    %269 = vmatpush1.msra.mxu0 0.0
    %270 = vmatprep.subr.mxu0 0.0
    %271 = vmatpush1.msra.mxu0 0.0
    %272 = vmatprep.subr.mxu0 0.0
    %273 = vmatpush1.msra.mxu0 0.0
    %274 = vmatprep.subr.mxu0 0.0
    %275 = vmatpush1.msra.mxu0 0.0
    %276 = vmatprep.subr.mxu0 0.0
    %277 = vmatpush1.msra.mxu0 0.0
    %278 = vmatprep.mubr.f32.mxu0 0.0
    %279 = vmatmul.mubr.f32.gmra.mrb[0].mxu0 %v206
    %v280 = vpop.f32.mrb[0].mxu0
    %v281 = vadd.f32 %v196, %v280
    %v282 = vpop.f32.mrb[0].mxu0
    %283 = vmatprep.mubr.f32.mxu0 0.0
    %284 = vmatmul.mubr.f32.gmra.mrb[0].mxu0 %v209
    %v285 = vpop.f32.mrb[0].mxu0
    %v286 = vadd.f32 %v201, %v285
    %v287 = vpop.f32.mrb[0].mxu0
    %288 = vdwg.mxu0
    %289 = vst [vmem:[#allocation7] sm:$0xff] %v281
    %290 = vst [vmem:[#allocation7 + $0x8] sm:$0xff] %v286
    // Predicated region
    $region26: #{tpu_custom_call.1} parent=1 // pred_check
      _
    $region27: #{tpu_custom_call.1} parent=1 // pred_check_branch
      %292 = sbr.rel (0) target = $region29
    $region28: #{tpu_custom_call.1} parent=1 // pred_region
      %s294 = ssub.s32 256, 256
      %295 = vsyncadd [#allocation4], %s294
      %s296 = sshll.u32 [#allocation7], 4
      %s297 = int_to_ptr.vmem [resolvable:$true] %s296
      %302 = dma.vmem_to_hbm [thread:$0]  %s297, 256, %s4, [#allocation4], 128, 128, 8
    $region29: #{tpu_custom_call.1} parent=1 // pred_fallthru
      _
    // Predicated region
    $region30: #{tpu_custom_call.1} parent=1 // pred_check
      _
    $region31: #{tpu_custom_call.1} parent=1 // pred_check_branch
      %304 = sbr.rel (0) target = $region33
    $region32: #{tpu_custom_call.1} parent=1 // pred_region
      %305 = dma.done [#allocation4], 256
    $region33: #{tpu_custom_call.1} parent=1 // pred_fallthru
      _
    %306 = vsyncpa [#allocation3], 1
    %307 = vsyncpa [#allocation6], 1
    %308 = vsyncpa [#allocation4], 1

</llo_original>
